<compile_context>
chip_gen: v6e
topology: v6e:2x2x1
jax: 0.10.0
libtpu: 0.0.40
codegen_flags: <defaults>
</compile_context>

<pallas_src>
import functools

import jax
import jax.numpy as jnp
from jax import lax
from jax.experimental import pallas as pl
from jax.experimental.pallas import tpu as pltpu


def _swap_threshold(p):
    """p in [0, 1] -> integer threshold compared against the high 16 random bits."""
    return max(0, min(1 << 16, int(round(float(p) * float(1 << 16)))))


def _feature_tiling(num_features):
    """Pick a lane-dense feature tile (128/256/512) and the padded feature width."""
    f_pad = 128 * pl.cdiv(num_features, 128)
    # 512-wide tiles are safe on v7x's 64 MiB VMEM for tabular batch sizes;
    # on v6e/v5e (128 MiB VMEM) this cap could be raised to 1024 for very wide tables.
    if f_pad % 512 == 0:
        tile_f = 512
    elif f_pad % 256 == 0:
        tile_f = 256
    else:
        tile_f = 128
    return tile_f, f_pad


def _swap_noise_kernel(bits_ref, x_ref, o_ref, *, p, batch):
    bits = bits_ref[...]            # (batch, tile_f) uint32 random bits
    x = x_ref[...]                  # (batch, tile_f) data block

    # Random row offset in [0, batch) from the LOW bits (exact for power-of-two
    # batch; otherwise a negligible modulo bias, like floor(rand * B) in torch).
    if batch & (batch - 1) == 0:
        l1 = (bits & jnp.uint32(batch - 1)).astype(jnp.int32)
    else:
        l1 = ((bits & jnp.uint32(0xFFFF)) % jnp.uint32(batch)).astype(jnp.int32)

    # Swap decision from the HIGH 16 bits (independent of l1).
    thresh = _swap_threshold(p)
    swap = (bits >> jnp.uint32(16)) < jnp.uint32(thresh)

    # Fold the mask into the offset once; offset 0 means "keep".
    off = jnp.where(swap, l1, 0)

    # Source row for every element of this block (wrap without a modulo).
    row = lax.broadcasted_iota(jnp.int32, x.shape, 0)
    src = row + off
    src = jnp.where(src >= batch, src - batch, src)

    # out[r, c] = x[src[r, c], c]: B-way select against sublane-broadcast rows.
    # NOTE: unrolled for small tabular batches; for large B switch to
    # lax.fori_loop + lax.dynamic_slice_in_dim to bound code size.
    out = x
    for s in range(batch):
        out = jnp.where(src == s, x[s:s + 1, :], out)
    o_ref[...] = out


def batch_swap_noise(x, key, p, training=True):
    """Pallas implementation of BatchSwapNoise.forward for x of shape (B, F)."""
    if not training:
        return x
    batch, num_features = x.shape
    tile_f, f_pad = _feature_tiling(num_features)

    bits = jax.random.bits(key, (batch, f_pad), dtype=jnp.uint32)
    if f_pad != num_features:
        x_in = jnp.pad(x, ((0, 0), (0, f_pad - num_features)))
    else:
        x_in = x

    block = pl.BlockSpec((batch, tile_f), lambda j: (0, j))
    kernel = functools.partial(_swap_noise_kernel, p=float(p), batch=batch)
    out = pl.pallas_call(
        kernel,
        out_shape=jax.ShapeDtypeStruct((batch, f_pad), x.dtype),
        grid=(f_pad // tile_f,),
        in_specs=[block, block],
        out_specs=block,
        compiler_params=pltpu.CompilerParams(
            dimension_semantics=("parallel",)),
    )(bits, x_in)
    if f_pad != num_features:
        out = out[:, :num_features]
    return out


def _reference(x, key, p):
    """Pure-JAX reference that mirrors the kernel's bit usage exactly."""
    batch, num_features = x.shape
    _, f_pad = _feature_tiling(num_features)
    bits = jax.random.bits(key, (batch, f_pad), dtype=jnp.uint32)[:, :num_features]
    if batch & (batch - 1) == 0:
        l1 = (bits & jnp.uint32(batch - 1)).astype(jnp.int32)
    else:
        l1 = ((bits & jnp.uint32(0xFFFF)) % jnp.uint32(batch)).astype(jnp.int32)
    swap = (bits >> jnp.uint32(16)) < jnp.uint32(_swap_threshold(p))
    off = jnp.where(swap, l1, 0)
    src = jnp.arange(batch, dtype=jnp.int32)[:, None] + off
    src = jnp.where(src >= batch, src - batch, src)
    return jnp.take_along_axis(x, src, axis=0)


if __name__ == "__main__":
    key = jax.random.PRNGKey(0)
    kx, kn = jax.random.split(key)
    B, F = 8, 32
    x = jax.random.normal(kx, (B, F), dtype=jnp.float32)
    p = 0.15

    out = jax.block_until_ready(batch_swap_noise(x, kn, p, training=True))
    assert out.shape == x.shape and out.dtype == x.dtype

    # Exact match against a pure-JAX reference consuming the same random bits.
    ref = _reference(x, kn, p)
    assert bool(jnp.all(out == ref)), "kernel does not match reference"

    # Every output element comes from the SAME column of the input.
    same_col = jnp.any(out[:, None, :] == x[None, :, :], axis=1)
    assert bool(jnp.all(same_col)), "output element not from same column"

    # p = 0 -> identity (through the kernel); eval mode -> identity.
    out_p0 = jax.block_until_ready(batch_swap_noise(x, kn, 0.0, training=True))
    assert bool(jnp.all(out_p0 == x))
    assert bool(jnp.all(batch_swap_noise(x, kn, p, training=False) == x))

    print("KERNEL_OK")
</pallas_src>

<mosaic_0001>
module attributes {stable_mosaic.version = 11 : i64} {
  func.func @_swap_noise_kernel(%arg0: i32, %arg1: memref<8x128xi32, #tpu.memory_space<vmem>>, %arg2: memref<8x128xf32, #tpu.memory_space<vmem>>, %arg3: memref<8x128xf32, #tpu.memory_space<vmem>>) attributes {dimension_semantics = [#tpu.dimension_semantics<parallel>], iteration_bounds = array<i64: 1>, scalar_prefetch = 0 : i64, scratch_operands = 0 : i64, tpu.core_type = #tpu.core_type<tc>, window_params = [{transform_indices = @transform_0, window_bounds = array<i64: 8, 128>}, {transform_indices = @transform_1, window_bounds = array<i64: 8, 128>}, {transform_indices = @transform_2, window_bounds = array<i64: 8, 128>}]} {
    %c0 = arith.constant 0 : index
    %c0_0 = arith.constant 0 : index
    %0 = vector.load %arg1[%c0, %c0_0] : memref<8x128xi32, #tpu.memory_space<vmem>>, vector<8x128xi32>
    %c0_1 = arith.constant 0 : index
    %c0_2 = arith.constant 0 : index
    %1 = vector.load %arg2[%c0_1, %c0_2] : memref<8x128xf32, #tpu.memory_space<vmem>>, vector<8x128xf32>
    %c7_i32 = arith.constant 7 : i32
    %2 = vector.broadcast %c7_i32 : i32 to vector<8x128xi32>
    %3 = arith.andi %0, %2 : vector<8x128xi32>
    %c16_i32 = arith.constant 16 : i32
    %4 = vector.broadcast %c16_i32 : i32 to vector<8x128xi32>
    %5 = arith.shrui %0, %4 : vector<8x128xi32>
    %c9830_i32 = arith.constant 9830 : i32
    %6 = vector.broadcast %c9830_i32 : i32 to vector<8x128xi32>
    %7 = arith.cmpi ult, %5, %6 : vector<8x128xi32>
    %c0_i32 = arith.constant 0 : i32
    %8 = vector.broadcast %c0_i32 : i32 to vector<8x128xi32>
    %9 = arith.select %7, %3, %8 : vector<8x128xi1>, vector<8x128xi32>
    %10 = tpu.iota {dimensions = array<i32: 0>} : vector<8x128xi32>
    %11 = arith.addi %10, %9 : vector<8x128xi32>
    %c8_i32 = arith.constant 8 : i32
    %12 = vector.broadcast %c8_i32 : i32 to vector<8x128xi32>
    %13 = arith.cmpi sge, %11, %12 : vector<8x128xi32>
    %c8_i32_3 = arith.constant 8 : i32
    %14 = vector.broadcast %c8_i32_3 : i32 to vector<8x128xi32>
    %15 = arith.subi %11, %14 : vector<8x128xi32>
    %16 = arith.select %13, %15, %11 : vector<8x128xi1>, vector<8x128xi32>
    %c0_i32_4 = arith.constant 0 : i32
    %17 = vector.broadcast %c0_i32_4 : i32 to vector<8x128xi32>
    %18 = arith.cmpi eq, %16, %17 : vector<8x128xi32>
    %19 = vector.extract_strided_slice %1 {offsets = [0, 0], sizes = [1, 128], strides = [1, 1]} : vector<8x128xf32> to vector<1x128xf32>
    %20 = vector.shape_cast %19 : vector<1x128xf32> to vector<1x128xf32>
    %21 = vector.broadcast %20 : vector<1x128xf32> to vector<8x128xf32>
    %22 = arith.select %18, %21, %1 : vector<8x128xi1>, vector<8x128xf32>
    %c1_i32 = arith.constant 1 : i32
    %23 = vector.broadcast %c1_i32 : i32 to vector<8x128xi32>
    %24 = arith.cmpi eq, %16, %23 : vector<8x128xi32>
    %25 = vector.extract_strided_slice %1 {offsets = [1, 0], sizes = [1, 128], strides = [1, 1]} : vector<8x128xf32> to vector<1x128xf32>
    %26 = vector.shape_cast %25 : vector<1x128xf32> to vector<1x128xf32>
    %27 = vector.broadcast %26 : vector<1x128xf32> to vector<8x128xf32>
    %28 = arith.select %24, %27, %22 : vector<8x128xi1>, vector<8x128xf32>
    %c2_i32 = arith.constant 2 : i32
    %29 = vector.broadcast %c2_i32 : i32 to vector<8x128xi32>
    %30 = arith.cmpi eq, %16, %29 : vector<8x128xi32>
    %31 = vector.extract_strided_slice %1 {offsets = [2, 0], sizes = [1, 128], strides = [1, 1]} : vector<8x128xf32> to vector<1x128xf32>
    %32 = vector.shape_cast %31 : vector<1x128xf32> to vector<1x128xf32>
    %33 = vector.broadcast %32 : vector<1x128xf32> to vector<8x128xf32>
    %34 = arith.select %30, %33, %28 : vector<8x128xi1>, vector<8x128xf32>
    %c3_i32 = arith.constant 3 : i32
    %35 = vector.broadcast %c3_i32 : i32 to vector<8x128xi32>
    %36 = arith.cmpi eq, %16, %35 : vector<8x128xi32>
    %37 = vector.extract_strided_slice %1 {offsets = [3, 0], sizes = [1, 128], strides = [1, 1]} : vector<8x128xf32> to vector<1x128xf32>
    %38 = vector.shape_cast %37 : vector<1x128xf32> to vector<1x128xf32>
    %39 = vector.broadcast %38 : vector<1x128xf32> to vector<8x128xf32>
    %40 = arith.select %36, %39, %34 : vector<8x128xi1>, vector<8x128xf32>
    %c4_i32 = arith.constant 4 : i32
    %41 = vector.broadcast %c4_i32 : i32 to vector<8x128xi32>
    %42 = arith.cmpi eq, %16, %41 : vector<8x128xi32>
    %43 = vector.extract_strided_slice %1 {offsets = [4, 0], sizes = [1, 128], strides = [1, 1]} : vector<8x128xf32> to vector<1x128xf32>
    %44 = vector.shape_cast %43 : vector<1x128xf32> to vector<1x128xf32>
    %45 = vector.broadcast %44 : vector<1x128xf32> to vector<8x128xf32>
    %46 = arith.select %42, %45, %40 : vector<8x128xi1>, vector<8x128xf32>
    %c5_i32 = arith.constant 5 : i32
    %47 = vector.broadcast %c5_i32 : i32 to vector<8x128xi32>
    %48 = arith.cmpi eq, %16, %47 : vector<8x128xi32>
    %49 = vector.extract_strided_slice %1 {offsets = [5, 0], sizes = [1, 128], strides = [1, 1]} : vector<8x128xf32> to vector<1x128xf32>
    %50 = vector.shape_cast %49 : vector<1x128xf32> to vector<1x128xf32>
    %51 = vector.broadcast %50 : vector<1x128xf32> to vector<8x128xf32>
    %52 = arith.select %48, %51, %46 : vector<8x128xi1>, vector<8x128xf32>
    %c6_i32 = arith.constant 6 : i32
    %53 = vector.broadcast %c6_i32 : i32 to vector<8x128xi32>
    %54 = arith.cmpi eq, %16, %53 : vector<8x128xi32>
    %55 = vector.extract_strided_slice %1 {offsets = [6, 0], sizes = [1, 128], strides = [1, 1]} : vector<8x128xf32> to vector<1x128xf32>
    %56 = vector.shape_cast %55 : vector<1x128xf32> to vector<1x128xf32>
    %57 = vector.broadcast %56 : vector<1x128xf32> to vector<8x128xf32>
    %58 = arith.select %54, %57, %52 : vector<8x128xi1>, vector<8x128xf32>
    %c7_i32_5 = arith.constant 7 : i32
    %59 = vector.broadcast %c7_i32_5 : i32 to vector<8x128xi32>
    %60 = arith.cmpi eq, %16, %59 : vector<8x128xi32>
    %61 = vector.extract_strided_slice %1 {offsets = [7, 0], sizes = [1, 128], strides = [1, 1]} : vector<8x128xf32> to vector<1x128xf32>
    %62 = vector.shape_cast %61 : vector<1x128xf32> to vector<1x128xf32>
    %63 = vector.broadcast %62 : vector<1x128xf32> to vector<8x128xf32>
    %64 = arith.select %60, %63, %58 : vector<8x128xi1>, vector<8x128xf32>
    %c0_6 = arith.constant 0 : index
    %c0_7 = arith.constant 0 : index
    %65 = vector.load %arg3[%c0_6, %c0_7] : memref<8x128xf32, #tpu.memory_space<vmem>>, vector<8x128xf32>
    tpu.vector_store %arg3[%c0_6, %c0_7], %64 {strides = array<i32>} : memref<8x128xf32, #tpu.memory_space<vmem>>, vector<8x128xf32>,
    return
  }
  func.func @transform_0(%arg0: i32) -> (i32, i32) {
    %c0_i32 = arith.constant 0 : i32
    %c0_i32_0 = arith.constant 0 : i32
    return %c0_i32, %arg0 : i32, i32
  }
  func.func @transform_1(%arg0: i32) -> (i32, i32) {
    %c0_i32 = arith.constant 0 : i32
    %c0_i32_0 = arith.constant 0 : i32
    return %c0_i32, %arg0 : i32, i32
  }
  func.func @transform_2(%arg0: i32) -> (i32, i32) {
    %c0_i32 = arith.constant 0 : i32
    %c0_i32_0 = arith.constant 0 : i32
    return %c0_i32, %arg0 : i32, i32
  }
}

</mosaic_0001>

<llo_original>
// kernel: tpu_custom_call.1
$region0: #{tpu_custom_call.1}
  #allocation0 [shape = 'u32[]', space=smem, size = 0x4, offset = 0x4, fixed_abs, tag = 'smem constant byte address 0x4 - core index']
  #allocation1 [shape = 'u32[144,128]{1,0:T(1,128)}', space=vmem, size = 0x12000, scoped, tag = 'internal scratch']
  %s0 = inlined_call_operand.hbm [shape: u32[8,128], index: 0, kind: input, shape index: {}]
  %s1 = inlined_call_operand.hbm [shape: f32[8,128], index: 1, kind: input, shape index: {}]
  %s2 = inlined_call_operand.hbm [shape: f32[8,128], index: 2, kind: output, shape index: {}]
  %s3 = sld [smem:[#allocation0]]
  $region26: #{tpu_custom_call.1} parent=0
    _
  %s5 = ssub.s32 1, %s3
  %s6 = scalar_select 0, %s5, %s3
  $region1: #{tpu_custom_call.1} parent=0
    #allocation2 [shape = 'u8[4096]{0}', space=vmem, size = 0x1000, scoped, tag = 'input window, operand 0, single buffered']
    #allocation3 [shape = 's32[1]{0}', space=sflag, size = 0x4, scoped, tag = 'scoped memory for tpu_custom_call.1']
    #allocation4 [shape = 's32[1]{0}', space=sflag, size = 0x4, scoped, tag = 'scoped memory for tpu_custom_call.1']
    #allocation5 [shape = 'u8[4096]{0}', space=vmem, size = 0x1000, scoped, tag = 'input window, operand 1, single buffered']
    #allocation6 [shape = 's32[1]{0}', space=sflag, size = 0x4, scoped, tag = 'scoped memory for tpu_custom_call.1']
    #allocation7 [shape = 'u8[4096]{0}', space=vmem, size = 0x1000, scoped, tag = 'output window, operand 0, single buffered']
    %7 = vsyncpa [#allocation3], 0
    %8 = vsyncpa [#allocation6], 0
    %9 = vsyncpa [#allocation4], 0
    // Predicated region
    $region2: #{tpu_custom_call.1} parent=1 // pred_check
      _
    $region3: #{tpu_custom_call.1} parent=1 // pred_check_branch
      %11 = sbr.rel (0) target = $region5
    $region4: #{tpu_custom_call.1} parent=1 // pred_region
      %s13 = ssub.s32 128, 128
      %14 = vsyncadd [#allocation3], %s13
      %s16 = sshll.u32 [#allocation2], 4
      %s17 = int_to_ptr.vmem [resolvable:$true] %s16
      %19 = dma.hbm_to_vmem [thread:$0]  %s0, 128, %s17, [#allocation3]
    $region5: #{tpu_custom_call.1} parent=1 // pred_fallthru
      _
    // Predicated region
    $region6: #{tpu_custom_call.1} parent=1 // pred_check
      _
    $region7: #{tpu_custom_call.1} parent=1 // pred_check_branch
      %21 = sbr.rel (0) target = $region9
    $region8: #{tpu_custom_call.1} parent=1 // pred_region
      %s23 = ssub.s32 128, 128
      %24 = vsyncadd [#allocation6], %s23
      %s26 = sshll.u32 [#allocation5], 4
      %s27 = int_to_ptr.vmem [resolvable:$true] %s26
      %29 = dma.hbm_to_vmem [thread:$0]  %s1, 128, %s27, [#allocation6]
    $region9: #{tpu_custom_call.1} parent=1 // pred_fallthru
      _
    // Predicated region
    $region10: #{tpu_custom_call.1} parent=1 // pred_check
      _
    $region11: #{tpu_custom_call.1} parent=1 // pred_check_branch
      %31 = sbr.rel (0) target = $region13
    $region12: #{tpu_custom_call.1} parent=1 // pred_region
      %32 = dma.done [#allocation3], 128
    $region13: #{tpu_custom_call.1} parent=1 // pred_fallthru
      _
    // Predicated region
    $region14: #{tpu_custom_call.1} parent=1 // pred_check
      _
    $region15: #{tpu_custom_call.1} parent=1 // pred_check_branch
      %34 = sbr.rel (0) target = $region17
    $region16: #{tpu_custom_call.1} parent=1 // pred_region
      %35 = dma.done [#allocation6], 128
    $region17: #{tpu_custom_call.1} parent=1 // pred_fallthru
      _
    %v36 = vld [vmem:[#allocation2] sm:$0xff]
    %v37 = vld [vmem:[#allocation5] sm:$0xff]
    %v38 = vand.u32 %v36, 7
    %v39 = vshrl.u32 %v36, 16
    %vm40 = vcmp.lt.u32.totalorder %v39, 9830
    %v41 = vsel %vm40, %v38, 0
    %v42 = vlaneseq
    %v43 = vshrl.u32 %v42, 7
    %v44 = vadd.s32 %v43, %v41
    %vm45 = vcmp.ge.s32.totalorder %v44, 8
    %v46 = vsub.s32 %v44, 8
    %v47 = vsel %vm45, %v46, %v44
    %vm48 = vcmp.eq.s32.totalorder %v47, 0
    %v49 = vlaneseq
    %v50 = vshrl.u32 %v49, 7
    %v51 = vsub.s32 0, %v50
    %v52 = vrot.slane %v37, %v51
    %v53 = vsel %vm48, %v52, %v37
    %vm54 = vcmp.eq.s32.totalorder %v47, 1
    %v55 = vlaneseq
    %v56 = vshrl.u32 %v55, 7
    %v57 = vsub.s32 1, %v56
    %v58 = vrot.slane %v37, %v57
    %v59 = vsel %vm54, %v58, %v53
    %vm60 = vcmp.eq.s32.totalorder %v47, 2
    %v61 = vlaneseq
    %v62 = vshrl.u32 %v61, 7
    %v63 = vsub.s32 2, %v62
    %v64 = vrot.slane %v37, %v63
    %v65 = vsel %vm60, %v64, %v59
    %vm66 = vcmp.eq.s32.totalorder %v47, 3
    %v67 = vlaneseq
    %v68 = vshrl.u32 %v67, 7
    %v69 = vsub.s32 3, %v68
    %v70 = vrot.slane %v37, %v69
    %v71 = vsel %vm66, %v70, %v65
    %vm72 = vcmp.eq.s32.totalorder %v47, 4
    %v73 = vlaneseq
    %v74 = vshrl.u32 %v73, 7
    %v75 = vsub.s32 4, %v74
    %v76 = vrot.slane %v37, %v75
    %v77 = vsel %vm72, %v76, %v71
    %vm78 = vcmp.eq.s32.totalorder %v47, 5
    %v79 = vlaneseq
    %v80 = vshrl.u32 %v79, 7
    %v81 = vsub.s32 5, %v80
    %v82 = vrot.slane %v37, %v81
    %v83 = vsel %vm78, %v82, %v77
    %vm84 = vcmp.eq.s32.totalorder %v47, 6
    %v85 = vlaneseq
    %v86 = vshrl.u32 %v85, 7
    %v87 = vsub.s32 6, %v86
    %v88 = vrot.slane %v37, %v87
    %v89 = vsel %vm84, %v88, %v83
    %vm90 = vcmp.eq.s32.totalorder %v47, 7
    %v91 = vlaneseq
    %v92 = vshrl.u32 %v91, 7
    %v93 = vsub.s32 7, %v92
    %v94 = vrot.slane %v37, %v93
    %v95 = vsel %vm90, %v94, %v89
    %96 = vst [vmem:[#allocation7] sm:$0xff] %v95
    // Predicated region
    $region18: #{tpu_custom_call.1} parent=1 // pred_check
      _
    $region19: #{tpu_custom_call.1} parent=1 // pred_check_branch
      %98 = sbr.rel (0) target = $region21
    $region20: #{tpu_custom_call.1} parent=1 // pred_region
      %s100 = ssub.s32 128, 128
      %101 = vsyncadd [#allocation4], %s100
      %s103 = sshll.u32 [#allocation7], 4
      %s104 = int_to_ptr.vmem [resolvable:$true] %s103
      %106 = dma.vmem_to_hbm [thread:$0]  %s104, 128, %s2, [#allocation4]
    $region21: #{tpu_custom_call.1} parent=1 // pred_fallthru
      _
    // Predicated region
    $region22: #{tpu_custom_call.1} parent=1 // pred_check
      _
    $region23: #{tpu_custom_call.1} parent=1 // pred_check_branch
      %108 = sbr.rel (0) target = $region25
    $region24: #{tpu_custom_call.1} parent=1 // pred_region
      %109 = dma.done [#allocation4], 128
    $region25: #{tpu_custom_call.1} parent=1 // pred_fallthru
      _
    %110 = vsyncpa [#allocation3], 1
    %111 = vsyncpa [#allocation6], 1
    %112 = vsyncpa [#allocation4], 1

</llo_original>
